<compile_context>
chip_gen: v7x
topology: tpu7x:2x2x1
jax: 0.10.0
libtpu: 0.0.40
codegen_flags: <defaults>
</compile_context>

<pallas_src>
import functools

import jax
import jax.numpy as jnp
import numpy as np
from jax.experimental import pallas as pl
from jax.experimental.pallas import tpu as pltpu


# ----------------------------- small helpers --------------------------------


def _cdiv(a: int, b: int) -> int:
    return -(-a // b)


def _round_up(n: int, m: int) -> int:
    return _cdiv(n, m) * m


def _sublane(dtype) -> int:
    """Dtype-native sublane packing multiple: 8 (f32), 16 (bf16), 32 (int8/fp8)."""
    return max(8, 32 // jnp.dtype(dtype).itemsize)


def _vmem_budget_bytes() -> int:
    """Generation-aware VMEM budget: ~3/4 of capacity (48 MiB v7x, 96 MiB v5e/v6e)."""
    try:
        cap = int(pltpu.get_tpu_info().vmem_capacity_bytes)
    except Exception:
        cap = 64 * 1024 * 1024  # conservative fallback = v7x per-TC capacity
    return (cap * 3) // 4


def _pick_seq_tile(S: int, resident_bytes_per_row: int, x_bytes_per_row: int,
                   sub: int, vmem_budget: int) -> int:
    """Sequence rows per grid step.

    - as large as the (double-buffered) VMEM budget allows, capped at ~16 MiB of x
      per step (per-step overhead ~0.35us is already negligible there),
    - a multiple of the dtype-native sublane count `sub` unless it covers all of S,
    - when splitting, prefer an even step count >= 4 (>= 2 pipelined blocks per
      v7x TensorCore, balanced megacore sharding).
    """
    if S <= sub:
        return S
    max_rows = min(int(vmem_budget * 0.8) // max(resident_bytes_per_row, 1),
                   (16 << 20) // max(x_bytes_per_row, 1))
    max_rows = max(sub, (max_rows // sub) * sub)

    steps = _cdiv(S, max_rows)
    if S >= 4 * sub:
        steps = max(steps, 4)
    rows = max(sub, (_cdiv(S, steps) // sub) * sub)

    actual = _cdiv(S, rows)
    if actual > 2 and actual % 2 and rows > sub:
        # one cheap nudge toward an even step count (v7x core balance)
        rows = max(sub, (_cdiv(S, actual + 1) // sub) * sub)
    return min(rows, S)


# ------------------------------- kernels -------------------------------------


def _add_pe_batch_first_kernel(x_ref, pe_ref, o_ref):
    # x/o: (B, seq_tile, D); pe: (seq_tile, D) -> broadcast over the leading batch dim
    o_ref[...] = (x_ref[...] + pe_ref[...][None, :, :]).astype(o_ref.dtype)


def _add_pe_seq_first_kernel(x_ref, pe_ref, o_ref):
    # x/o: (seq_tile, B, D); pe: (seq_tile, D) -> broadcast over the middle batch dim
    o_ref[...] = (x_ref[...] + pe_ref[...][:, None, :]).astype(o_ref.dtype)


def _add_pe_lane_fold_kernel(x_ref, pe_ref, o_ref, *, batch: int):
    # x/o: (seq_tile, B*D); pe: (seq_tile, D).
    # Replicate pe along the lane axis (D is a multiple of 128, so this is a clean
    # lane-block concat); the copy is VPU/XLU filler under a DMA-bound kernel.
    pe = pe_ref[...]
    pe_rep = pe if batch == 1 else jnp.concatenate([pe] * batch, axis=-1)
    o_ref[...] = (x_ref[...] + pe_rep).astype(o_ref.dtype)


# ------------------------------- wrapper --------------------------------------


def learned_position_embedding(x, pe_table, *, batch_first: bool = False,
                               out_dtype=None):
    """Pallas equivalent of LearnedPositionEmbedding.forward.

    x        : (S, B, D) if batch_first=False, else (B, S, D)   (no transpose done)
    pe_table : (max_len, D) learned embedding weights
    """
    max_len, D = pe_table.shape
    if batch_first:
        B, S, Dx = x.shape
    else:
        S, B, Dx = x.shape
    assert Dx == D, "embedding dim mismatch"

    if out_dtype is None:
        out_dtype = jnp.result_type(x.dtype, pe_table.dtype)  # PyTorch promotion
    out_dtype = jnp.dtype(out_dtype)

    isx = jnp.dtype(x.dtype).itemsize
    iso = out_dtype.itemsize
    ispe = jnp.dtype(pe_table.dtype).itemsize
    sub = max(_sublane(x.dtype), _sublane(out_dtype))
    lane_D = _round_up(D, 128)

    # Layout selection for batch_first=False: fold B into the lane axis when the
    # native (seq, B, D) layout would be badly sublane-padded and D is lane-aligned.
    lane_fold = (not batch_first) and (D % 128 == 0) and (B < sub)

    # Padded per-sequence-row VMEM footprint (what actually lives in VMEM).
    if batch_first:
        row_x, row_o = B * lane_D * isx, B * lane_D * iso
    elif lane_fold:
        row_x, row_o = B * D * isx, B * D * iso
    else:
        row_x = _round_up(B, _sublane(x.dtype)) * lane_D * isx
        row_o = _round_up(B, _sublane(out_dtype)) * lane_D * iso
    row_pe = lane_D * ispe

    budget = _vmem_budget_bytes()
    resident_per_row = 2 * (row_x + row_o + row_pe)  # double-buffered in/out/pe
    seq_tile = _pick_seq_tile(S, resident_per_row, row_x, sub, budget)
    grid = (_cdiv(S, seq_tile),)

    # Position table: skip the XLA gather in the common S <= max_len case (positions
    # is just arange, so the BlockSpec index_map on the raw table is already right).
    if S <= max_len and (seq_tile % 8 == 0 or seq_tile == max_len):
        pe_in = pe_table
    else:
        positions = jnp.clip(jnp.arange(S), 0, max_len - 1)
        pe_in = pe_table[positions]  # (S, D) — only for clamping / odd tiny tiles

    pe_spec = pl.BlockSpec((seq_tile, D), lambda i: (i, 0))

    if batch_first:
        x_in = x
        x_spec = pl.BlockSpec((B, seq_tile, D), lambda i: (0, i, 0))
        kernel = _add_pe_batch_first_kernel
        out_shape = jax.ShapeDtypeStruct((B, S, D), out_dtype)
    elif lane_fold:
        x_in = x.reshape(S, B * D)  # free: collapses contiguous trailing dims
        x_spec = pl.BlockSpec((seq_tile, B * D), lambda i: (i, 0))
        kernel = functools.partial(_add_pe_lane_fold_kernel, batch=B)
        out_shape = jax.ShapeDtypeStruct((S, B * D), out_dtype)
    else:
        x_in = x
        x_spec = pl.BlockSpec((seq_tile, B, D), lambda i: (i, 0, 0))
        kernel = _add_pe_seq_first_kernel
        out_shape = jax.ShapeDtypeStruct((S, B, D), out_dtype)

    out = pl.pallas_call(
        kernel,
        out_shape=out_shape,
        grid_spec=pltpu.PrefetchScalarGridSpec(
            num_scalar_prefetch=0,
            grid=grid,
            in_specs=[x_spec, pe_spec],
            out_specs=x_spec,
        ),
        compiler_params=pltpu.CompilerParams(
            dimension_semantics=("parallel",),
            vmem_limit_bytes=int(budget),
        ),
    )(x_in, pe_in)

    if lane_fold:
        out = out.reshape(S, B, D)
    return out


# ------------------------------- reference ------------------------------------


def _reference(x, pe_table, *, batch_first: bool = False):
    """Plain-JAX reference mirroring the PyTorch forward."""
    if batch_first:
        x = jnp.transpose(x, (1, 0, 2))
    S = x.shape[0]
    max_len = pe_table.shape[0]
    positions = jnp.clip(jnp.arange(S), 0, max_len - 1)
    pe = pe_table[positions][:, None, :]  # (S, 1, D)
    out = pe + x
    if batch_first:
        out = jnp.transpose(out, (1, 0, 2))
    return out


def _check(out, x, pe_table, *, batch_first):
    np.testing.assert_allclose(
        np.asarray(out),
        np.asarray(_reference(x, pe_table, batch_first=batch_first)),
        rtol=1e-6, atol=1e-6)


if __name__ == "__main__":
    key = jax.random.PRNGKey(0)
    keys = jax.random.split(key, 10)

    # ---- (a) S=8 > max_len=6 (clamping) + lane-fold path, batch_first=False ----
    max_len, D, S, B = 6, 128, 8, 2
    pe1 = jax.random.normal(keys[0], (max_len, D), dtype=jnp.float32)
    x_sf = jax.random.normal(keys[1], (S, B, D), dtype=jnp.float32)
    out = jax.block_until_ready(
        learned_position_embedding(x_sf, pe1, batch_first=False))
    _check(out, x_sf, pe1, batch_first=False)

    # ---- (b) same data, batch_first=True (native (B, S, D), no transpose) ----
    x_bf = jnp.transpose(x_sf, (1, 0, 2))
    out = jax.block_until_ready(
        learned_position_embedding(x_bf, pe1, batch_first=True))
    _check(out, x_bf, pe1, batch_first=True)

    # ---- (c) S <= max_len: no wrapper gather, multi-step grid, batch_first=True ----
    max_len2, D2, S2, B2 = 64, 256, 48, 4
    pe2 = jax.random.normal(keys[2], (max_len2, D2), dtype=jnp.float32)
    x2 = jax.random.normal(keys[3], (B2, S2, D2), dtype=jnp.float32)
    out = jax.block_until_ready(
        learned_position_embedding(x2, pe2, batch_first=True))
    _check(out, x2, pe2, batch_first=True)

    # ---- (d) D not a multiple of 128 -> native seq-first layout (no lane fold) ----
    max_len3, D3, S3, B3 = 16, 96, 8, 2
    pe3 = jax.random.normal(keys[4], (max_len3, D3), dtype=jnp.float32)
    x3 = jax.random.normal(keys[5], (S3, B3, D3), dtype=jnp.float32)
    out = jax.block_until_ready(
        learned_position_embedding(x3, pe3, batch_first=False))
    _check(out, x3, pe3, batch_first=False)

    # ---- (e) mixed dtype (bf16 x + f32 table): PyTorch-style promotion to f32 ----
    max_len4, D4, S4, B4 = 32, 128, 16, 2
    pe4 = jax.random.normal(keys[6], (max_len4, D4), dtype=jnp.float32)
    x4 = jax.random.normal(keys[7], (B4, S4, D4), dtype=jnp.bfloat16)
    out = jax.block_until_ready(
        learned_position_embedding(x4, pe4, batch_first=True))
    assert out.dtype == jnp.float32
    _check(out, x4, pe4, batch_first=True)

    # ---- (f) S > max_len with multiple grid steps (clamping + multi-tile) ----
    max_len5, D5, S5, B5 = 32, 256, 48, 4
    pe5 = jax.random.normal(keys[8], (max_len5, D5), dtype=jnp.float32)
    x5 = jax.random.normal(keys[9], (B5, S5, D5), dtype=jnp.float32)
    out = jax.block_until_ready(
        learned_position_embedding(x5, pe5, batch_first=True))
    _check(out, x5, pe5, batch_first=True)

    print("KERNEL_OK")
</pallas_src>

<mosaic_0001>
module attributes {stable_mosaic.version = 11 : i64} {
  func.func @_add_pe_lane_fold_kernel(%arg0: i32, %arg1: memref<8x256xf32, #tpu.memory_space<vmem>>, %arg2: memref<8x128xf32, #tpu.memory_space<vmem>>, %arg3: memref<8x256xf32, #tpu.memory_space<vmem>>) attributes {dimension_semantics = [#tpu.dimension_semantics<parallel>], iteration_bounds = array<i64: 1>, scalar_prefetch = 0 : i64, scratch_operands = 0 : i64, tpu.core_type = #tpu.core_type<tc>, window_params = [{transform_indices = @transform_0, window_bounds = array<i64: 8, 256>}, {transform_indices = @transform_1, window_bounds = array<i64: 8, 128>}, {transform_indices = @transform_2, window_bounds = array<i64: 8, 256>}]} {
    %c0 = arith.constant 0 : index
    %c0_0 = arith.constant 0 : index
    %0 = vector.load %arg2[%c0, %c0_0] : memref<8x128xf32, #tpu.memory_space<vmem>>, vector<8x128xf32>
    %1 = tpu.concatenate %0, %0 in 1 : vector<8x128xf32>, vector<8x128xf32> -> vector<8x256xf32>
    %c0_1 = arith.constant 0 : index
    %c0_2 = arith.constant 0 : index
    %2 = vector.load %arg1[%c0_1, %c0_2] : memref<8x256xf32, #tpu.memory_space<vmem>>, vector<8x256xf32>
    %3 = arith.addf %2, %1 : vector<8x256xf32>
    %c0_3 = arith.constant 0 : index
    %c0_4 = arith.constant 0 : index
    %4 = vector.load %arg3[%c0_3, %c0_4] : memref<8x256xf32, #tpu.memory_space<vmem>>, vector<8x256xf32>
    tpu.vector_store %arg3[%c0_3, %c0_4], %3 {strides = array<i32>} : memref<8x256xf32, #tpu.memory_space<vmem>>, vector<8x256xf32>,
    return
  }
  func.func @transform_0(%arg0: i32) -> (i32, i32) {
    %c0_i32 = arith.constant 0 : i32
    %c0_i32_0 = arith.constant 0 : i32
    return %arg0, %c0_i32 : i32, i32
  }
  func.func @transform_1(%arg0: i32) -> (i32, i32) {
    %c0_i32 = arith.constant 0 : i32
    %c0_i32_0 = arith.constant 0 : i32
    return %arg0, %c0_i32 : i32, i32
  }
  func.func @transform_2(%arg0: i32) -> (i32, i32) {
    %c0_i32 = arith.constant 0 : i32
    %c0_i32_0 = arith.constant 0 : i32
    return %arg0, %c0_i32 : i32, i32
  }
}

</mosaic_0001>

<llo_original>
// kernel: tpu_custom_call.1
$region0: #{tpu_custom_call.1}
  #allocation0 [shape = 'u32[]', space=smem, size = 0x4, offset = 0x4, fixed_abs, tag = 'smem constant byte address 0x4 - core index']
  #allocation1 [shape = 'u32[144,128]{1,0:T(1,128)}', space=vmem, size = 0x12000, scoped, tag = 'internal scratch']
  %s0 = inlined_call_operand.hbm [shape: f32[8,256], index: 0, kind: input, shape index: {}]
  %s1 = inlined_call_operand.hbm [shape: f32[8,128], index: 1, kind: input, shape index: {}]
  %s2 = inlined_call_operand.hbm [shape: f32[8,256], index: 2, kind: output, shape index: {}]
  %s3 = sld [smem:[#allocation0]]
  $region26: #{tpu_custom_call.1} parent=0
    _
  %s5 = ssub.s32 1, %s3
  %s6 = scalar_select 0, %s5, %s3
  $region1: #{tpu_custom_call.1} parent=0
    #allocation2 [shape = 'u8[8192]{0}', space=vmem, size = 0x2000, scoped, tag = 'input window, operand 0, single buffered']
    #allocation3 [shape = 's32[1]{0}', space=sflag, size = 0x4, scoped, tag = 'scoped memory for tpu_custom_call.1']
    #allocation4 [shape = 's32[1]{0}', space=sflag, size = 0x4, scoped, tag = 'scoped memory for tpu_custom_call.1']
    #allocation5 [shape = 'u8[4096]{0}', space=vmem, size = 0x1000, scoped, tag = 'input window, operand 1, single buffered']
    #allocation6 [shape = 's32[1]{0}', space=sflag, size = 0x4, scoped, tag = 'scoped memory for tpu_custom_call.1']
    #allocation7 [shape = 'u8[8192]{0}', space=vmem, size = 0x2000, scoped, tag = 'output window, operand 0, single buffered']
    %7 = vsyncpa [#allocation3], 0
    %8 = vsyncpa [#allocation6], 0
    %9 = vsyncpa [#allocation4], 0
    // Predicated region
    $region2: #{tpu_custom_call.1} parent=1 // pred_check
      _
    $region3: #{tpu_custom_call.1} parent=1 // pred_check_branch
      %11 = sbr.rel (0) target = $region5
    $region4: #{tpu_custom_call.1} parent=1 // pred_region
      %s13 = ssub.s32 256, 256
      %14 = vsyncadd [#allocation3], %s13
      %s16 = sshll.u32 [#allocation2], 4
      %s17 = int_to_ptr.vmem [resolvable:$true] %s16
      %19 = dma.hbm_to_vmem [thread:$0]  %s0, 256, %s17, [#allocation3]
    $region5: #{tpu_custom_call.1} parent=1 // pred_fallthru
      _
    // Predicated region
    $region6: #{tpu_custom_call.1} parent=1 // pred_check
      _
    $region7: #{tpu_custom_call.1} parent=1 // pred_check_branch
      %21 = sbr.rel (0) target = $region9
    $region8: #{tpu_custom_call.1} parent=1 // pred_region
      %s23 = ssub.s32 128, 128
      %24 = vsyncadd [#allocation6], %s23
      %s26 = sshll.u32 [#allocation5], 4
      %s27 = int_to_ptr.vmem [resolvable:$true] %s26
      %29 = dma.hbm_to_vmem [thread:$0]  %s1, 128, %s27, [#allocation6]
    $region9: #{tpu_custom_call.1} parent=1 // pred_fallthru
      _
    // Predicated region
    $region10: #{tpu_custom_call.1} parent=1 // pred_check
      _
    $region11: #{tpu_custom_call.1} parent=1 // pred_check_branch
      %31 = sbr.rel (0) target = $region13
    $region12: #{tpu_custom_call.1} parent=1 // pred_region
      %32 = dma.done [#allocation3], 256
    $region13: #{tpu_custom_call.1} parent=1 // pred_fallthru
      _
    // Predicated region
    $region14: #{tpu_custom_call.1} parent=1 // pred_check
      _
    $region15: #{tpu_custom_call.1} parent=1 // pred_check_branch
      %34 = sbr.rel (0) target = $region17
    $region16: #{tpu_custom_call.1} parent=1 // pred_region
      %35 = dma.done [#allocation6], 128
    $region17: #{tpu_custom_call.1} parent=1 // pred_fallthru
      _
    %v36 = vld [vmem:[#allocation5] sm:$0xff]
    %v37 = vld [vmem:[#allocation2] sm:$0xff]
    %v38 = vld [vmem:[#allocation2 + $0x8] sm:$0xff]
    %v39 = vadd.f32 %v37, %v36
    %v40 = vadd.f32 %v38, %v36
    %41 = vst [vmem:[#allocation7] sm:$0xff] %v39
    %42 = vst [vmem:[#allocation7 + $0x8] sm:$0xff] %v40
    // Predicated region
    $region18: #{tpu_custom_call.1} parent=1 // pred_check
      _
    $region19: #{tpu_custom_call.1} parent=1 // pred_check_branch
      %44 = sbr.rel (0) target = $region21
    $region20: #{tpu_custom_call.1} parent=1 // pred_region
      %s46 = ssub.s32 256, 256
      %47 = vsyncadd [#allocation4], %s46
      %s49 = sshll.u32 [#allocation7], 4
      %s50 = int_to_ptr.vmem [resolvable:$true] %s49
      %52 = dma.vmem_to_hbm [thread:$0]  %s50, 256, %s2, [#allocation4]
    $region21: #{tpu_custom_call.1} parent=1 // pred_fallthru
      _
    // Predicated region
    $region22: #{tpu_custom_call.1} parent=1 // pred_check
      _
    $region23: #{tpu_custom_call.1} parent=1 // pred_check_branch
      %54 = sbr.rel (0) target = $region25
    $region24: #{tpu_custom_call.1} parent=1 // pred_region
      %55 = dma.done [#allocation4], 256
    $region25: #{tpu_custom_call.1} parent=1 // pred_fallthru
      _
    %56 = vsyncpa [#allocation3], 1
    %57 = vsyncpa [#allocation6], 1
    %58 = vsyncpa [#allocation4], 1

</llo_original>
